<compile_context>
chip_gen: v7x
topology: tpu7x:2x2x1
jax: 0.10.0
libtpu: 0.0.40
codegen_flags: <defaults>
</compile_context>

<pallas_src>
import functools
import math

import jax
import jax.numpy as jnp
from jax.experimental import pallas as pl
from jax.experimental.pallas import tpu as pltpu


def _round_up(x, m):
    return ((x + m - 1) // m) * m


def _int_pow(u, p):
    """u**p for integer p >= 1 via square-and-multiply (VALU only; 3 muls for p=5)."""
    result = None
    base = u
    e = int(p)
    while e > 0:
        if e & 1:
            result = base if result is None else result * base
        e >>= 1
        if e:
            base = base * base
    return result


def _radial_embedding_kernel(x_ref, o_ref, *, r_max, p, num_bessel, prefactor):
    # x_ref: (8, tC)  edge lengths, dense slab (edges on sublanes AND lanes)
    # o_ref: (K, 8, tC)  bessel(x) * cutoff(x)
    x = x_ref[...].astype(jnp.float32)                          # (8, tC)

    # ---- polynomial cutoff envelope (Horner form) ----
    u = x * (1.0 / r_max)
    up = _int_pow(u, p)                                         # u**p, VALU only
    pf = float(p)
    c1 = (pf + 1.0) * (pf + 2.0) / 2.0
    c2 = pf * (pf + 2.0)
    c3 = pf * (pf + 1.0) / 2.0
    env = 1.0 - up * (c1 - u * (c2 - c3 * u))
    env = jnp.where(x < r_max, env, 0.0)

    # One reciprocal per edge, folded with sqrt(2/r_max) and the envelope.
    fac = (prefactor * env) * pl.reciprocal(x, approx=False)    # (8, tC)

    # ---- bessel basis: sin(n*theta) from ONE sin + ONE cos (Chebyshev) ----
    theta = x * (math.pi / r_max)
    s_cur = jnp.sin(theta)                                      # s_1
    s_prev = jnp.zeros_like(s_cur)                              # s_0
    two_cos = 2.0 * jnp.cos(theta)
    for n in range(num_bessel):                                 # unrolled, K small
        o_ref[n, :, :] = (s_cur * fac).astype(o_ref.dtype)      # full-slab store
        s_prev, s_cur = s_cur, two_cos * s_cur - s_prev         # s_{n+2}


def radial_embedding_block(edge_lengths, node_attrs=None, edge_index=None,
                           atomic_numbers=None, *, r_max=5.0, num_bessel=8,
                           num_polynomial_cutoff=5, tile_e=32768,
                           lane_dense_output=False, out_dtype=jnp.float32):
    """Pallas implementation of RadialEmbeddingBlock.forward.

    edge_lengths: [E, 1] (or [E]) float.
    Returns [E, num_bessel] (PyTorch layout) by default; with
    lane_dense_output=True returns [num_bessel, E] and skips the final
    transpose HBM pass (preferred when the consumer contracts over K).
    node_attrs / edge_index / atomic_numbers are unused (no distance transform).
    """
    x = jnp.asarray(edge_lengths, jnp.float32).reshape(-1)      # (E,)
    E = int(x.shape[0])
    K = int(num_bessel)

    # Lay edges out as an (8, C) slab so all per-edge math runs at full vreg
    # occupancy (a (1, E) row wastes 7/8 of every vector op).
    C = pl.cdiv(E, 8)
    E_pad = 8 * C
    if E_pad != E:
        # Pad with 1.0 (finite, > 0) — padded lanes are sliced off at the end.
        x = jnp.concatenate([x, jnp.full((E_pad - E,), 1.0, jnp.float32)])
    x2 = x.reshape(8, C)                                        # row-major, free

    # Column tile: default 32768 edges/step (4096 cols) to bury the ~0.35 us
    # per-step grid overhead; 128-aligned; capped so the grid keeps >=2 steps
    # (lets the edge axis split across TensorCores on v7x) whenever possible.
    if C <= 256:
        t_c = C                                                 # single full-extent block
    else:
        t_req = max(128, _round_up(max(1, int(tile_e)) // 8, 128))
        t_c = min(t_req, _round_up(pl.cdiv(C, 2), 128))
    grid = (pl.cdiv(C, t_c),)

    kernel = functools.partial(
        _radial_embedding_kernel,
        r_max=float(r_max),
        p=int(num_polynomial_cutoff),
        num_bessel=K,
        prefactor=float(math.sqrt(2.0 / r_max)),
    )

    out3 = pl.pallas_call(
        kernel,
        out_shape=jax.ShapeDtypeStruct((K, 8, C), out_dtype),
        grid_spec=pltpu.PrefetchScalarGridSpec(
            num_scalar_prefetch=0,
            grid=grid,
            in_specs=[pl.BlockSpec((8, t_c), lambda i: (0, i))],
            out_specs=pl.BlockSpec((K, 8, t_c), lambda i: (0, 0, i)),
        ),
        compiler_params=pltpu.CompilerParams(
            dimension_semantics=("parallel",)),
    )(x2)

    out_ke = out3.reshape(K, E_pad)                             # free row-major merge
    if E_pad != E:
        out_ke = out_ke[:, :E]
    if lane_dense_output:
        return out_ke                                           # (K, E), no extra HBM pass
    # PyTorch layout [E, K]; this transpose is a separate XLA HBM pass — pass
    # lane_dense_output=True and consume (K, E) directly when possible.
    # TODO(synk): optionally fuse the downstream radial-MLP Linear(K->H) here
    # (jnp.dot on the lane-dense block) to skip the intermediate entirely.
    return out_ke.T


def _reference(edge_lengths, r_max, num_bessel, p):
    """Plain-JAX reference mirroring the PyTorch module."""
    x = jnp.asarray(edge_lengths, jnp.float32)
    u = x / r_max
    c1 = (p + 1.0) * (p + 2.0) / 2.0
    c2 = p * (p + 2.0)
    c3 = p * (p + 1.0) / 2.0
    env = 1.0 - c1 * u**p + c2 * u**(p + 1) - c3 * u**(p + 2)
    env = env * (x < r_max).astype(jnp.float32)
    w = jnp.arange(1, num_bessel + 1, dtype=jnp.float32) * (math.pi / r_max)
    radial = math.sqrt(2.0 / r_max) * jnp.sin(w * x) / x
    return radial * env


if __name__ == "__main__":
    key = jax.random.PRNGKey(0)
    k1, k2 = jax.random.split(key)

    # Small synthetic graph: 8 nodes, 64 edges, num_bessel=8.
    num_nodes = 8
    num_edges = 64
    num_bessel = 8
    num_poly_cutoff = 5
    r_max = 5.0

    edge_lengths = jax.random.uniform(
        k1, (num_edges, 1), jnp.float32, minval=0.5, maxval=6.0)  # some > r_max
    node_attrs = jax.random.normal(k2, (num_nodes, 4), jnp.float32)
    edge_index = jnp.stack([
        jnp.arange(num_edges, dtype=jnp.int32) % num_nodes,
        (jnp.arange(num_edges, dtype=jnp.int32) + 1) % num_nodes,
    ])
    atomic_numbers = jnp.ones((num_nodes,), jnp.int32)

    out = radial_embedding_block(
        edge_lengths, node_attrs, edge_index, atomic_numbers,
        r_max=r_max, num_bessel=num_bessel,
        num_polynomial_cutoff=num_poly_cutoff)
    out = jax.block_until_ready(out)

    ref = _reference(edge_lengths, r_max, num_bessel, float(num_poly_cutoff))
    assert out.shape == (num_edges, num_bessel)
    max_err = float(jnp.max(jnp.abs(out - ref)))
    assert jnp.allclose(out, ref, atol=5e-5, rtol=1e-5), max_err

    print("KERNEL_OK")
</pallas_src>

<mosaic_0001>
module attributes {stable_mosaic.version = 11 : i64} {
  func.func @_radial_embedding_kernel(%arg0: i32, %arg1: memref<8x8xf32, #tpu.memory_space<vmem>>, %arg2: memref<8x8x8xf32, #tpu.memory_space<vmem>>) attributes {dimension_semantics = [#tpu.dimension_semantics<parallel>], iteration_bounds = array<i64: 1>, scalar_prefetch = 0 : i64, scratch_operands = 0 : i64, tpu.core_type = #tpu.core_type<tc>, window_params = [{transform_indices = @transform_0, window_bounds = array<i64: 8, 8>}, {transform_indices = @transform_1, window_bounds = array<i64: 8, 8, 8>}]} {
    %c0 = arith.constant 0 : index
    %c0_0 = arith.constant 0 : index
    %0 = vector.load %arg1[%c0, %c0_0] : memref<8x8xf32, #tpu.memory_space<vmem>>, vector<8x8xf32>
    %cst = arith.constant 2.000000e-01 : f32
    %1 = vector.broadcast %cst : f32 to vector<8x8xf32>
    %2 = arith.mulf %0, %1 : vector<8x8xf32>
    %3 = arith.mulf %2, %2 : vector<8x8xf32>
    %4 = arith.mulf %3, %3 : vector<8x8xf32>
    %5 = arith.mulf %2, %4 : vector<8x8xf32>
    %cst_1 = arith.constant 1.500000e+01 : f32
    %6 = vector.broadcast %cst_1 : f32 to vector<8x8xf32>
    %7 = arith.mulf %6, %2 : vector<8x8xf32>
    %cst_2 = arith.constant 3.500000e+01 : f32
    %8 = vector.broadcast %cst_2 : f32 to vector<8x8xf32>
    %9 = arith.subf %8, %7 : vector<8x8xf32>
    %10 = arith.mulf %2, %9 : vector<8x8xf32>
    %cst_3 = arith.constant 2.100000e+01 : f32
    %11 = vector.broadcast %cst_3 : f32 to vector<8x8xf32>
    %12 = arith.subf %11, %10 : vector<8x8xf32>
    %13 = arith.mulf %5, %12 : vector<8x8xf32>
    %cst_4 = arith.constant 1.000000e+00 : f32
    %14 = vector.broadcast %cst_4 : f32 to vector<8x8xf32>
    %15 = arith.subf %14, %13 : vector<8x8xf32>
    %cst_5 = arith.constant 5.000000e+00 : f32
    %16 = vector.broadcast %cst_5 : f32 to vector<8x8xf32>
    %17 = arith.cmpf olt, %0, %16 : vector<8x8xf32>
    %cst_6 = arith.constant 0.000000e+00 : f32
    %18 = vector.broadcast %cst_6 : f32 to vector<8x8xf32>
    %19 = arith.select %17, %15, %18 : vector<8x8xi1>, vector<8x8xf32>
    %cst_7 = arith.constant 0.632455527 : f32
    %20 = vector.broadcast %cst_7 : f32 to vector<8x8xf32>
    %21 = arith.mulf %20, %19 : vector<8x8xf32>
    %22 = tpu.reciprocal %0 : vector<8x8xf32> -> vector<8x8xf32>
    %23 = arith.mulf %21, %22 : vector<8x8xf32>
    %cst_8 = arith.constant 0.628318548 : f32
    %24 = vector.broadcast %cst_8 : f32 to vector<8x8xf32>
    %25 = arith.mulf %0, %24 : vector<8x8xf32>
    %26 = math.sin %25 : vector<8x8xf32>
    %cst_9 = arith.constant 0.000000e+00 : f32
    %27 = vector.broadcast %cst_9 : f32 to vector<8x8xf32>
    %28 = math.cos %25 : vector<8x8xf32>
    %cst_10 = arith.constant 2.000000e+00 : f32
    %29 = vector.broadcast %cst_10 : f32 to vector<8x8xf32>
    %30 = arith.mulf %29, %28 : vector<8x8xf32>
    %31 = arith.mulf %26, %23 : vector<8x8xf32>
    %c0_11 = arith.constant 0 : index
    %c0_12 = arith.constant 0 : index
    %c0_13 = arith.constant 0 : index
    %32 = vector.load %arg2[%c0_11, %c0_12, %c0_13] : memref<8x8x8xf32, #tpu.memory_space<vmem>>, vector<1x8x8xf32>
    %33 = vector.shape_cast %32 : vector<1x8x8xf32> to vector<8x8xf32>
    %34 = vector.shape_cast %31 : vector<8x8xf32> to vector<1x8x8xf32>
    tpu.vector_store %arg2[%c0_11, %c0_12, %c0_13], %34 {strides = array<i32>} : memref<8x8x8xf32, #tpu.memory_space<vmem>>, vector<1x8x8xf32>,
    %35 = arith.mulf %30, %26 : vector<8x8xf32>
    %36 = arith.subf %35, %27 : vector<8x8xf32>
    %37 = arith.mulf %36, %23 : vector<8x8xf32>
    %c1 = arith.constant 1 : index
    %c0_14 = arith.constant 0 : index
    %c0_15 = arith.constant 0 : index
    %38 = vector.load %arg2[%c1, %c0_14, %c0_15] : memref<8x8x8xf32, #tpu.memory_space<vmem>>, vector<1x8x8xf32>
    %39 = vector.shape_cast %38 : vector<1x8x8xf32> to vector<8x8xf32>
    %40 = vector.shape_cast %37 : vector<8x8xf32> to vector<1x8x8xf32>
    tpu.vector_store %arg2[%c1, %c0_14, %c0_15], %40 {strides = array<i32>} : memref<8x8x8xf32, #tpu.memory_space<vmem>>, vector<1x8x8xf32>,
    %41 = arith.mulf %30, %36 : vector<8x8xf32>
    %42 = arith.subf %41, %26 : vector<8x8xf32>
    %43 = arith.mulf %42, %23 : vector<8x8xf32>
    %c2 = arith.constant 2 : index
    %c0_16 = arith.constant 0 : index
    %c0_17 = arith.constant 0 : index
    %44 = vector.load %arg2[%c2, %c0_16, %c0_17] : memref<8x8x8xf32, #tpu.memory_space<vmem>>, vector<1x8x8xf32>
    %45 = vector.shape_cast %44 : vector<1x8x8xf32> to vector<8x8xf32>
    %46 = vector.shape_cast %43 : vector<8x8xf32> to vector<1x8x8xf32>
    tpu.vector_store %arg2[%c2, %c0_16, %c0_17], %46 {strides = array<i32>} : memref<8x8x8xf32, #tpu.memory_space<vmem>>, vector<1x8x8xf32>,
    %47 = arith.mulf %30, %42 : vector<8x8xf32>
    %48 = arith.subf %47, %36 : vector<8x8xf32>
    %49 = arith.mulf %48, %23 : vector<8x8xf32>
    %c3 = arith.constant 3 : index
    %c0_18 = arith.constant 0 : index
    %c0_19 = arith.constant 0 : index
    %50 = vector.load %arg2[%c3, %c0_18, %c0_19] : memref<8x8x8xf32, #tpu.memory_space<vmem>>, vector<1x8x8xf32>
    %51 = vector.shape_cast %50 : vector<1x8x8xf32> to vector<8x8xf32>
    %52 = vector.shape_cast %49 : vector<8x8xf32> to vector<1x8x8xf32>
    tpu.vector_store %arg2[%c3, %c0_18, %c0_19], %52 {strides = array<i32>} : memref<8x8x8xf32, #tpu.memory_space<vmem>>, vector<1x8x8xf32>,
    %53 = arith.mulf %30, %48 : vector<8x8xf32>
    %54 = arith.subf %53, %42 : vector<8x8xf32>
    %55 = arith.mulf %54, %23 : vector<8x8xf32>
    %c4 = arith.constant 4 : index
    %c0_20 = arith.constant 0 : index
    %c0_21 = arith.constant 0 : index
    %56 = vector.load %arg2[%c4, %c0_20, %c0_21] : memref<8x8x8xf32, #tpu.memory_space<vmem>>, vector<1x8x8xf32>
    %57 = vector.shape_cast %56 : vector<1x8x8xf32> to vector<8x8xf32>
    %58 = vector.shape_cast %55 : vector<8x8xf32> to vector<1x8x8xf32>
    tpu.vector_store %arg2[%c4, %c0_20, %c0_21], %58 {strides = array<i32>} : memref<8x8x8xf32, #tpu.memory_space<vmem>>, vector<1x8x8xf32>,
    %59 = arith.mulf %30, %54 : vector<8x8xf32>
    %60 = arith.subf %59, %48 : vector<8x8xf32>
    %61 = arith.mulf %60, %23 : vector<8x8xf32>
    %c5 = arith.constant 5 : index
    %c0_22 = arith.constant 0 : index
    %c0_23 = arith.constant 0 : index
    %62 = vector.load %arg2[%c5, %c0_22, %c0_23] : memref<8x8x8xf32, #tpu.memory_space<vmem>>, vector<1x8x8xf32>
    %63 = vector.shape_cast %62 : vector<1x8x8xf32> to vector<8x8xf32>
    %64 = vector.shape_cast %61 : vector<8x8xf32> to vector<1x8x8xf32>
    tpu.vector_store %arg2[%c5, %c0_22, %c0_23], %64 {strides = array<i32>} : memref<8x8x8xf32, #tpu.memory_space<vmem>>, vector<1x8x8xf32>,
    %65 = arith.mulf %30, %60 : vector<8x8xf32>
    %66 = arith.subf %65, %54 : vector<8x8xf32>
    %67 = arith.mulf %66, %23 : vector<8x8xf32>
    %c6 = arith.constant 6 : index
    %c0_24 = arith.constant 0 : index
    %c0_25 = arith.constant 0 : index
    %68 = vector.load %arg2[%c6, %c0_24, %c0_25] : memref<8x8x8xf32, #tpu.memory_space<vmem>>, vector<1x8x8xf32>
    %69 = vector.shape_cast %68 : vector<1x8x8xf32> to vector<8x8xf32>
    %70 = vector.shape_cast %67 : vector<8x8xf32> to vector<1x8x8xf32>
    tpu.vector_store %arg2[%c6, %c0_24, %c0_25], %70 {strides = array<i32>} : memref<8x8x8xf32, #tpu.memory_space<vmem>>, vector<1x8x8xf32>,
    %71 = arith.mulf %30, %66 : vector<8x8xf32>
    %72 = arith.subf %71, %60 : vector<8x8xf32>
    %73 = arith.mulf %72, %23 : vector<8x8xf32>
    %c7 = arith.constant 7 : index
    %c0_26 = arith.constant 0 : index
    %c0_27 = arith.constant 0 : index
    %74 = vector.load %arg2[%c7, %c0_26, %c0_27] : memref<8x8x8xf32, #tpu.memory_space<vmem>>, vector<1x8x8xf32>
    %75 = vector.shape_cast %74 : vector<1x8x8xf32> to vector<8x8xf32>
    %76 = vector.shape_cast %73 : vector<8x8xf32> to vector<1x8x8xf32>
    tpu.vector_store %arg2[%c7, %c0_26, %c0_27], %76 {strides = array<i32>} : memref<8x8x8xf32, #tpu.memory_space<vmem>>, vector<1x8x8xf32>,
    return
  }
  func.func @transform_0(%arg0: i32) -> (i32, i32) {
    %c0_i32 = arith.constant 0 : i32
    %c0_i32_0 = arith.constant 0 : i32
    return %c0_i32, %arg0 : i32, i32
  }
  func.func @transform_1(%arg0: i32) -> (i32, i32, i32) {
    %c0_i32 = arith.constant 0 : i32
    %c0_i32_0 = arith.constant 0 : i32
    %c0_i32_1 = arith.constant 0 : i32
    return %c0_i32, %c0_i32_0, %arg0 : i32, i32, i32
  }
}

</mosaic_0001>

<llo_original>
// kernel: tpu_custom_call.1
$region0: #{tpu_custom_call.1}
  #allocation0 [shape = 'u32[]', space=smem, size = 0x4, offset = 0x4, fixed_abs, tag = 'smem constant byte address 0x4 - core index']
  #allocation1 [shape = 'u32[144,128]{1,0:T(1,128)}', space=vmem, size = 0x12000, scoped, tag = 'internal scratch']
  %s0 = inlined_call_operand.hbm [shape: f32[8,8], index: 0, kind: input, shape index: {}]
  %s1 = inlined_call_operand.hbm [shape: f32[8,8,8], index: 1, kind: output, shape index: {}]
  %s2 = sld [smem:[#allocation0]]
  $region18: #{tpu_custom_call.1} parent=0
    _
  %s4 = ssub.s32 1, %s2
  %s5 = scalar_select 0, %s4, %s2
  $region1: #{tpu_custom_call.1} parent=0
    #allocation2 [shape = 'u8[4096]{0}', space=vmem, size = 0x1000, scoped, tag = 'input window, operand 0, single buffered']
    #allocation3 [shape = 's32[1]{0}', space=sflag, size = 0x4, scoped, tag = 'scoped memory for tpu_custom_call.1']
    #allocation4 [shape = 's32[1]{0}', space=sflag, size = 0x4, scoped, tag = 'scoped memory for tpu_custom_call.1']
    #allocation5 [shape = 'u8[32768]{0}', space=vmem, size = 0x8000, scoped, tag = 'output window, operand 0, single buffered']
    %6 = vsyncpa [#allocation3], 0
    %7 = vsyncpa [#allocation4], 0
    // Predicated region
    $region2: #{tpu_custom_call.1} parent=1 // pred_check
      _
    $region3: #{tpu_custom_call.1} parent=1 // pred_check_branch
      %9 = sbr.rel (0) target = $region5
    $region4: #{tpu_custom_call.1} parent=1 // pred_region
      %s11 = ssub.s32 128, 128
      %12 = vsyncadd [#allocation3], %s11
      %s14 = sshll.u32 [#allocation2], 4
      %s15 = int_to_ptr.vmem [resolvable:$true] %s14
      %17 = dma.hbm_to_vmem [thread:$0]  %s0, 128, %s15, [#allocation3]
    $region5: #{tpu_custom_call.1} parent=1 // pred_fallthru
      _
    // Predicated region
    $region6: #{tpu_custom_call.1} parent=1 // pred_check
      _
    $region7: #{tpu_custom_call.1} parent=1 // pred_check_branch
      %19 = sbr.rel (0) target = $region9
    $region8: #{tpu_custom_call.1} parent=1 // pred_region
      %20 = dma.done [#allocation3], 128
    $region9: #{tpu_custom_call.1} parent=1 // pred_fallthru
      _
    %v21 = vld [vmem:[#allocation2] sm:$0xff]
    %v22 = vmul.f32 %v21, 0.2
    %v23 = vmul.f32 %v22, %v22
    %v24 = vmul.f32 %v23, %v23
    %v25 = vmul.f32 %v22, %v24
    %v26 = vmul.f32 %v22, 15.0
    %v27 = vsub.f32 35.0, %v26
    %v28 = vmul.f32 %v22, %v27
    %v29 = vsub.f32 21.0, %v28
    %v30 = vmul.f32 %v25, %v29
    %v31 = vsub.f32 1.0, %v30
    %vm32 = vcmp.lt.f32.partialorder %v21, 5.0
    %v33 = vsel %vm32, %v31, 0.0
    %v34 = vmul.f32 %v33, 0.6324555
    %v35 = vrcp.pop %v21
    %v36 = vmul.f32 %v34, %v35
    %v37 = vmul.f32 %v21, 0.62831855
    %v38 = vand.u32 2147483647, %v37
    %vm39 = vcmp.le.f32.partialorder %v38, 0.7853982
    %vm40 = vcmp.lt.s32.totalorder %v37, 0
    %v41 = vand.u32 %v37, 2139095040
    %v42 = vshrl.u32 %v41, 23
    %v43 = vsub.s32 %v42, 127
    %v44 = vand.u32 2147483647, %v37
    %v45 = vand.u32 %v44, 8388607
    %v46 = vor.u32 %v45, 8388608
    %v47 = vsub.s32 0, %v46
    %v48 = vadd.s32 %v43, 1
    %vm49 = vcmp.gt.s32.totalorder %v48, 0
    %v50 = vsel %vm49, %v48, 0
    %v51 = vshrl.u32 %v50, 5
    %v52 = vand.u32 %v50, 31
    %v53 = vsub.s32 32, %v52
    %v54 = vshrl.u32 683565275, %v53
    %v55 = vshll.u32 683565275, %v52
    %v56 = vshrl.u32 2475754826, %v53
    %v57 = vor.u32 %v55, %v56
    %v58 = vshll.u32 2475754826, %v52
    %v59 = vshrl.u32 2131351028, %v53
    %v60 = vor.u32 %v58, %v59
    %v61 = vshll.u32 2131351028, %v52
    %v62 = vshrl.u32 2102212464, %v53
    %v63 = vor.u32 %v61, %v62
    %v64 = vshll.u32 2102212464, %v52
    %v65 = vshrl.u32 920167782, %v53
    %v66 = vor.u32 %v64, %v65
    %v67 = vshll.u32 920167782, %v52
    %v68 = vshrl.u32 1326507024, %v53
    %v69 = vor.u32 %v67, %v68
    %vm70 = vcmp.lt.s32.totalorder %v51, 1
    %vm71 = vcmp.lt.s32.totalorder %v51, 2
    %vm72 = vcmp.lt.s32.totalorder %v51, 3
    %vm73 = vcmp.lt.s32.totalorder %v51, 4
    %v74 = vsel %vm70, %v54, %v57
    %v75 = vsel %vm73, %v63, 2102212464
    %v76 = vsel %vm72, %v60, %v75
    %v77 = vsel %vm71, %v74, %v76
    %v78 = vsel %vm70, %v57, %v60
    %v79 = vsel %vm73, %v66, 920167782
    %v80 = vsel %vm72, %v63, %v79
    %v81 = vsel %vm71, %v78, %v80
    %v82 = vsel %vm70, %v60, %v63
    %v83 = vsel %vm73, %v69, 1326507024
    %v84 = vsel %vm72, %v66, %v83
    %v85 = vsel %vm71, %v82, %v84
    %v86 = vshll.u32 %v46, 8
    %v87 = vmul.u32.u64.compose %v86, %v85
    %v88 = vextract.low.u32 %v87
    %v89 = vextract.high.u32 %v87
    %v90 = vmul.u32.u64.compose %v86, %v81
    %v91 = vextract.low.u32 %v90
    %v92 = vextract.high.u32 %v90
    %v93 = vmul.u32 %v86, %v77
    %v94 = vadd.s32 %v89, %v91
    %vm95 = vc.u32 %v89, %v91
    %v96 = vadd.s32 %v92, 1
    %v97 = vsel %vm95, %v96, %v92
    %v98 = vadd.s32 %v93, %v97
    %v99 = vadd.s32 %v98, 536870912
    %v100 = vshrl.u32 %v99, 30
    %v101 = vshll.u32 %v100, 30
    %v102 = vsub.s32 %v98, %v101
    %vm103 = vcmp.lt.s32.totalorder %v102, 0
    %v104 = vsub.s32 0, %v102
    %v105 = vsel %vm103, %v104, %v102
    %v106 = vclz %v105
    %v107 = vsub.s32 %v106, 2
    %vm108 = vcmp.gt.s32.totalorder 0, %v107
    %v109 = vsel %vm108, 0, %v107
    %v110 = vsub.s32 32, %v109
    %v111 = vshll.u32 %v102, %v109
    %v112 = vshrl.u32 %v94, %v110
    %v113 = vor.u32 %v111, %v112
    %v114 = vsub.s32 4294967266, %v109
    %v115 = vadd.s32 %v114, 127
    %v116 = vshll.u32 %v115, 23
    %v117 = vor.u32 4788187, %v116
    %v118 = vand.u32 2147483647, %v117
    %v120 = vcvt.s32.f32 %v113
    %v121 = vmul.f32 %v120, %v118
    %v122 = vxor.u32 %v121, 2147483648
    %v123 = vsel %vm40, %v122, %v121
    %v124 = vsub.s32 4, %v100
    %v125 = vsel %vm40, %v124, %v100
    %v126 = vsel %vm39, %v37, %v123
    %v127 = vsel %vm39, 0, %v125
    %v128 = vcosq.f32.pop %v126
    %v129 = vsinq.f32.pop %v126
    %vm130 = vweird.f32 %v37
    %v131 = vadd.s32 %v127, 3
    %v132 = vand.u32 %v131, 3
    %vm133 = vcmp.lt.s32.totalorder %v132, 2
    %vm134 = vcmp.eq.s32.totalorder %v132, 0
    %v135 = vxor.u32 %v129, 2147483648
    %v136 = vsel %vm134, %v128, %v135
    %vm137 = vcmp.eq.s32.totalorder %v132, 2
    %v138 = vxor.u32 %v128, 2147483648
    %v139 = vsel %vm137, %v138, %v129
    %v140 = vsel %vm133, %v136, %v139
    %v141 = vsel %vm130, nan, %v140
    %v142 = vand.u32 2147483647, %v37
    %vm143 = vcmp.le.f32.partialorder %v142, 0.7853982
    %vm144 = vcmp.lt.s32.totalorder %v37, 0
    %v145 = vand.u32 %v37, 2139095040
    %v146 = vshrl.u32 %v145, 23
    %v147 = vsub.s32 %v146, 127
    %v148 = vand.u32 2147483647, %v37
    %v149 = vand.u32 %v148, 8388607
    %v150 = vor.u32 %v149, 8388608
    %v151 = vsub.s32 0, %v150
    %v152 = vadd.s32 %v147, 1
    %vm153 = vcmp.gt.s32.totalorder %v152, 0
    %v154 = vsel %vm153, %v152, 0
    %v155 = vshrl.u32 %v154, 5
    %v156 = vand.u32 %v154, 31
    %v157 = vsub.s32 32, %v156
    %v158 = vshrl.u32 683565275, %v157
    %v159 = vshll.u32 683565275, %v156
    %v160 = vshrl.u32 2475754826, %v157
    %v161 = vor.u32 %v159, %v160
    %v162 = vshll.u32 2475754826, %v156
    %v163 = vshrl.u32 2131351028, %v157
    %v164 = vor.u32 %v162, %v163
    %v165 = vshll.u32 2131351028, %v156
    %v166 = vshrl.u32 2102212464, %v157
    %v167 = vor.u32 %v165, %v166
    %v168 = vshll.u32 2102212464, %v156
    %v169 = vshrl.u32 920167782, %v157
    %v170 = vor.u32 %v168, %v169
    %v171 = vshll.u32 920167782, %v156
    %v172 = vshrl.u32 1326507024, %v157
    %v173 = vor.u32 %v171, %v172
    %vm174 = vcmp.lt.s32.totalorder %v155, 1
    %vm175 = vcmp.lt.s32.totalorder %v155, 2
    %vm176 = vcmp.lt.s32.totalorder %v155, 3
    %vm177 = vcmp.lt.s32.totalorder %v155, 4
    %v178 = vsel %vm174, %v158, %v161
    %v179 = vsel %vm177, %v167, 2102212464
    %v180 = vsel %vm176, %v164, %v179
    %v181 = vsel %vm175, %v178, %v180
    %v182 = vsel %vm174, %v161, %v164
    %v183 = vsel %vm177, %v170, 920167782
    %v184 = vsel %vm176, %v167, %v183
    %v185 = vsel %vm175, %v182, %v184
    %v186 = vsel %vm174, %v164, %v167
    %v187 = vsel %vm177, %v173, 1326507024
    %v188 = vsel %vm176, %v170, %v187
    %v189 = vsel %vm175, %v186, %v188
    %v190 = vshll.u32 %v150, 8
    %v191 = vmul.u32.u64.compose %v190, %v189
    %v192 = vextract.low.u32 %v191
    %v193 = vextract.high.u32 %v191
    %v194 = vmul.u32.u64.compose %v190, %v185
    %v195 = vextract.low.u32 %v194
    %v196 = vextract.high.u32 %v194
    %v197 = vmul.u32 %v190, %v181
    %v198 = vadd.s32 %v193, %v195
    %vm199 = vc.u32 %v193, %v195
    %v200 = vadd.s32 %v196, 1
    %v201 = vsel %vm199, %v200, %v196
    %v202 = vadd.s32 %v197, %v201
    %v203 = vadd.s32 %v202, 536870912
    %v204 = vshrl.u32 %v203, 30
    %v205 = vshll.u32 %v204, 30
    %v206 = vsub.s32 %v202, %v205
    %vm207 = vcmp.lt.s32.totalorder %v206, 0
    %v208 = vsub.s32 0, %v206
    %v209 = vsel %vm207, %v208, %v206
    %v210 = vclz %v209
    %v211 = vsub.s32 %v210, 2
    %vm212 = vcmp.gt.s32.totalorder 0, %v211
    %v213 = vsel %vm212, 0, %v211
    %v214 = vsub.s32 32, %v213
    %v215 = vshll.u32 %v206, %v213
    %v216 = vshrl.u32 %v198, %v214
    %v217 = vor.u32 %v215, %v216
    %v218 = vsub.s32 4294967266, %v213
    %v219 = vadd.s32 %v218, 127
    %v220 = vshll.u32 %v219, 23
    %v221 = vor.u32 4788187, %v220
    %v222 = vand.u32 2147483647, %v221
    %v224 = vcvt.s32.f32 %v217
    %v225 = vmul.f32 %v224, %v222
    %v226 = vxor.u32 %v225, 2147483648
    %v227 = vsel %vm144, %v226, %v225
    %v228 = vsub.s32 4, %v204
    %v229 = vsel %vm144, %v228, %v204
    %v230 = vsel %vm143, %v37, %v227
    %v231 = vsel %vm143, 0, %v229
    %v232 = vcosq.f32.pop %v230
    %v233 = vsinq.f32.pop %v230
    %vm234 = vweird.f32 %v37
    %v235 = vand.u32 %v231, 3
    %vm236 = vcmp.lt.s32.totalorder %v235, 2
    %vm237 = vcmp.eq.s32.totalorder %v235, 0
    %v238 = vxor.u32 %v233, 2147483648
    %v239 = vsel %vm237, %v232, %v238
    %vm240 = vcmp.eq.s32.totalorder %v235, 2
    %v241 = vxor.u32 %v232, 2147483648
    %v242 = vsel %vm240, %v241, %v233
    %v243 = vsel %vm236, %v239, %v242
    %v244 = vsel %vm234, nan, %v243
    %v245 = vmul.f32 %v244, 2.0
    %v246 = vmul.f32 %v141, %v36
    %vm247 = vcmask 64512
    %248 = vst.msk [vmem:[#allocation5] sm:$0xff] %vm247, %v246
    %v249 = vmul.f32 %v245, %v141
    %v250 = vmul.f32 %v249, %v36
    %s251 = scalar_lea.vmem [#allocation5], 8
    %252 = vst.msk [vmem:[%s251] sm:$0xff] %vm247, %v250
    %v253 = vmul.f32 %v245, %v249
    %v254 = vsub.f32 %v253, %v141
    %v255 = vmul.f32 %v254, %v36
    %s256 = scalar_lea.vmem [#allocation5], 16
    %257 = vst.msk [vmem:[%s256] sm:$0xff] %vm247, %v255
    %v258 = vmul.f32 %v245, %v254
    %v259 = vsub.f32 %v258, %v249
    %v260 = vmul.f32 %v259, %v36
    %s261 = scalar_lea.vmem [#allocation5], 24
    %262 = vst.msk [vmem:[%s261] sm:$0xff] %vm247, %v260
    %v263 = vmul.f32 %v245, %v259
    %v264 = vsub.f32 %v263, %v254
    %v265 = vmul.f32 %v264, %v36
    %s266 = scalar_lea.vmem [#allocation5], 32
    %267 = vst.msk [vmem:[%s266] sm:$0xff] %vm247, %v265
    %v268 = vmul.f32 %v245, %v264
    %v269 = vsub.f32 %v268, %v259
    %v270 = vmul.f32 %v269, %v36
    %s271 = scalar_lea.vmem [#allocation5], 40
    %272 = vst.msk [vmem:[%s271] sm:$0xff] %vm247, %v270
    %v273 = vmul.f32 %v245, %v269
    %v274 = vsub.f32 %v273, %v264
    %v275 = vmul.f32 %v274, %v36
    %s276 = scalar_lea.vmem [#allocation5], 48
    %277 = vst.msk [vmem:[%s276] sm:$0xff] %vm247, %v275
    %v278 = vmul.f32 %v245, %v274
    %v279 = vsub.f32 %v278, %v269
    %v280 = vmul.f32 %v279, %v36
    %s281 = scalar_lea.vmem [#allocation5], 56
    %282 = vst.msk [vmem:[%s281] sm:$0xff] %vm247, %v280
    // Predicated region
    $region10: #{tpu_custom_call.1} parent=1 // pred_check
      _
    $region11: #{tpu_custom_call.1} parent=1 // pred_check_branch
      %284 = sbr.rel (0) target = $region13
    $region12: #{tpu_custom_call.1} parent=1 // pred_region
      %s286 = ssub.s32 1024, 1024
      %287 = vsyncadd [#allocation4], %s286
      %s288 = sshll.u32 [#allocation5], 4
      %s289 = int_to_ptr.vmem [resolvable:$true] %s288
      %294 = dma.vmem_to_hbm [thread:$0]  %s289, 1024, %s1, [#allocation4], 128, 128, 8
    $region13: #{tpu_custom_call.1} parent=1 // pred_fallthru
      _
    // Predicated region
    $region14: #{tpu_custom_call.1} parent=1 // pred_check
      _
    $region15: #{tpu_custom_call.1} parent=1 // pred_check_branch
      %296 = sbr.rel (0) target = $region17
    $region16: #{tpu_custom_call.1} parent=1 // pred_region
      %297 = dma.done [#allocation4], 1024
    $region17: #{tpu_custom_call.1} parent=1 // pred_fallthru
      _
    %298 = vsyncpa [#allocation3], 1
    %299 = vsyncpa [#allocation4], 1

</llo_original>
